<compile_context>
chip_gen: v7x
topology: tpu7x:2x2x1
jax: 0.10.0
libtpu: 0.0.40
codegen_flags: <defaults>
</compile_context>

<pallas_src>
import jax
import jax.numpy as jnp
from jax import lax
from jax.experimental import pallas as pl
from jax.experimental.pallas import tpu as pltpu


def _round_up(x: int, m: int) -> int:
    return ((x + m - 1) // m) * m


def _window_dim(needed: int, full: int, grain: int) -> int:
    """Smallest grain-aligned window covering `needed`, else the full extent."""
    w = _round_up(needed, grain)
    return full if w >= full else w


def linear_alt_kernel(x_ref, w_ref, mask_w_ref, mask_b_ref, o_ref):
    """One batch-row block: out = tanh((x - mx) @ (w - mw).T) + mo."""
    F_out, F_in = w_ref.shape

    x = x_ref[...]                       # [tm, F_in]     f32
    w = w_ref[...]                       # [F_out, F_in]  f32 (replicated block)

    mx = mask_b_ref[:, :F_in]            # [tm, F_in]
    mo = mask_b_ref[:, :F_out]           # [tm, F_out]
    mw = mask_w_ref[:F_out, :F_in]       # [F_out, F_in]

    # f32 VPU subtractions, then bf16 operands into a single MXU matmul with
    # f32 accumulation (exact factoring of the 4-matmul PyTorch form).
    a = (x - mx).astype(jnp.bfloat16)
    b = (w - mw).astype(jnp.bfloat16)

    acc = lax.dot_general(
        a, b,
        dimension_numbers=(((1,), (1,)), ((), ())),   # == a @ b.T, no transpose
        preferred_element_type=jnp.float32,
    )                                                  # [tm, F_out] f32

    # TODO(synk): at real MNIST widths, pad F_out to a multiple of 128 for a
    # lane-dense store; at F_out=16 the wrapper-side pad would cost more than
    # the masked vst it removes.
    o_ref[...] = (jnp.tanh(acc) + mo).astype(o_ref.dtype)


def linear_alt_forward(x, weight, mask, bias=None, *, block_b=512, interpret=False):
    """Pallas TPU forward for LinearAlt / MyFunction2 / SGXF.

    out = tanh((x - M[:B,:F_in]) @ (weight - M[:F_out,:F_in]).T) + M[:B,:F_out]

    `bias` is accepted for API parity but is unused: MyFunction2.forward never
    adds it (verified against the PyTorch source).
    """
    B, F_in = x.shape
    F_out, f_in_w = weight.shape
    if f_in_w != F_in:
        raise ValueError(f"weight {weight.shape} incompatible with x {x.shape}")

    need_rows = max(B, F_out)
    need_cols = max(F_in, F_out)
    m_rows, m_cols_full = mask.shape
    if m_rows < need_rows or m_cols_full < need_cols:
        raise ValueError(
            f"mask {mask.shape} must cover at least [{need_rows}, {need_cols}] "
            "(super_mega_mask contract)")

    # Batch-row tile: largest 8-aligned tile <= block_b covering the batch.
    tm = min(_round_up(B, 8), _round_up(block_b, 8))
    grid_b = pl.cdiv(B, tm)

    # Bounded mask windows (rounded to the (8,128) grain): only these windows
    # are DMA'd, never the full super_mega_mask.
    mw_rows = _window_dim(F_out, m_rows, 8)
    m_cols = _window_dim(need_cols, m_cols_full, 128)

    # VMEM budget: double-buffered blocks + headroom; clamp to v7x's 64 MiB.
    block_bytes = (
        tm * F_in * x.dtype.itemsize
        + F_out * F_in * weight.dtype.itemsize
        + (mw_rows + tm) * m_cols * mask.dtype.itemsize
        + tm * F_out * 4
    )
    vmem_limit = int(min(max(2 * block_bytes + (4 << 20), 8 << 20), 64 << 20))

    in_specs = [
        pl.BlockSpec((tm, F_in), lambda i: (i, 0)),          # x: batch rows
        pl.BlockSpec((F_out, F_in), lambda i: (0, 0)),       # weight: replicated
        pl.BlockSpec((mw_rows, m_cols), lambda i: (0, 0)),   # mask window for mw
        pl.BlockSpec((tm, m_cols), lambda i: (i, 0)),        # mask rows for mx/mo
    ]
    out_specs = pl.BlockSpec((tm, F_out), lambda i: (i, 0))

    return pl.pallas_call(
        linear_alt_kernel,
        out_shape=jax.ShapeDtypeStruct((B, F_out), jnp.float32),
        grid=(grid_b,),
        in_specs=in_specs,
        out_specs=out_specs,
        compiler_params=pltpu.CompilerParams(
            dimension_semantics=("parallel",),   # shards row blocks across TCs on v7x
            vmem_limit_bytes=vmem_limit,
        ),
        interpret=interpret,
    )(x, weight, mask, mask)


def _reference(x, weight, mask):
    """Plain-JAX reference written exactly as SGXF (unfactored 4-matmul form)."""
    B, F_in = x.shape
    F_out = weight.shape[0]
    mx = mask[:B, :F_in]
    mw = mask[:F_out, :F_in]
    mo = mask[:B, :F_out]
    return jnp.tanh(x @ weight.T - mx @ weight.T - x @ mw.T + mx @ mw.T) + mo


if __name__ == "__main__":
    # Small shapes consistent with the module: batch=8, in_features=32, out_features=16.
    B, F_in, F_out = 8, 32, 16

    key = jax.random.PRNGKey(0)
    k_mask, k_x, k_w, k_b, k_x2 = jax.random.split(key, 5)

    # Deterministic stand-in for the pickled super_mega_mask; intentionally
    # larger than the used [max(B,F_out), max(F_in,F_out)] corner so the
    # bounded-window mask DMA is actually exercised.
    mask = jax.random.normal(k_mask, (128, 256), dtype=jnp.float32)

    # LinearAlt.__init__: weight ~ U(-0.1, 0.1) + mask corner; bias unused in forward.
    weight = jax.random.uniform(k_w, (F_out, F_in), jnp.float32, -0.1, 0.1)
    weight = weight + mask[:F_out, :F_in]
    bias = jax.random.uniform(k_b, (F_out,), jnp.float32, -0.1, 0.1)  # unused

    x = jax.random.normal(k_x, (B, F_in), dtype=jnp.float32)

    out = linear_alt_forward(x, weight, mask, bias)
    out = jax.block_until_ready(out)
    ref = _reference(x, weight, mask)
    assert out.shape == (B, F_out)
    # bf16 MXU operands with f32 accumulation -> loosened tolerance vs f32 ref.
    assert jnp.allclose(out, ref, atol=2e-2, rtol=2e-2), float(jnp.max(jnp.abs(out - ref)))

    # Also exercise the multi-step batch grid (the path used at larger B / on v7x).
    B2 = 32
    x2 = jax.random.normal(k_x2, (B2, F_in), dtype=jnp.float32)
    out2 = jax.block_until_ready(linear_alt_forward(x2, weight, mask, bias, block_b=8))
    ref2 = _reference(x2, weight, mask)
    assert out2.shape == (B2, F_out)
    assert jnp.allclose(out2, ref2, atol=2e-2, rtol=2e-2), float(jnp.max(jnp.abs(out2 - ref2)))

    print("KERNEL_OK")
</pallas_src>

<mosaic_0001>
module attributes {stable_mosaic.version = 11 : i64} {
  func.func @linear_alt_kernel(%arg0: i32, %arg1: memref<8x32xf32, #tpu.memory_space<vmem>>, %arg2: memref<16x32xf32, #tpu.memory_space<vmem>>, %arg3: memref<16x128xf32, #tpu.memory_space<vmem>>, %arg4: memref<8x128xf32, #tpu.memory_space<vmem>>, %arg5: memref<8x16xf32, #tpu.memory_space<vmem>>) attributes {dimension_semantics = [#tpu.dimension_semantics<parallel>], iteration_bounds = array<i64: 1>, scalar_prefetch = 0 : i64, scratch_operands = 0 : i64, tpu.core_type = #tpu.core_type<tc>, window_params = [{transform_indices = @transform_0, window_bounds = array<i64: 8, 32>}, {pipeline_mode = #tpu.pipeline_mode<synchronous>, transform_indices = @transform_1, window_bounds = array<i64: 16, 32>}, {transform_indices = @transform_2, window_bounds = array<i64: 16, 128>}, {transform_indices = @transform_3, window_bounds = array<i64: 8, 128>}, {transform_indices = @transform_4, window_bounds = array<i64: 8, 16>}]} {
    %c0 = arith.constant 0 : index
    %c0_0 = arith.constant 0 : index
    %0 = vector.load %arg1[%c0, %c0_0] : memref<8x32xf32, #tpu.memory_space<vmem>>, vector<8x32xf32>
    %c0_1 = arith.constant 0 : index
    %c0_2 = arith.constant 0 : index
    %1 = vector.load %arg2[%c0_1, %c0_2] : memref<16x32xf32, #tpu.memory_space<vmem>>, vector<16x32xf32>
    %c0_3 = arith.constant 0 : index
    %c0_4 = arith.constant 0 : index
    %2 = vector.load %arg4[%c0_3, %c0_4] : memref<8x128xf32, #tpu.memory_space<vmem>>, vector<8x32xf32>
    %c0_5 = arith.constant 0 : index
    %c0_6 = arith.constant 0 : index
    %3 = vector.load %arg4[%c0_5, %c0_6] : memref<8x128xf32, #tpu.memory_space<vmem>>, vector<8x16xf32>
    %c0_7 = arith.constant 0 : index
    %c0_8 = arith.constant 0 : index
    %4 = vector.load %arg3[%c0_7, %c0_8] : memref<16x128xf32, #tpu.memory_space<vmem>>, vector<16x32xf32>
    %5 = arith.subf %0, %2 : vector<8x32xf32>
    %6 = arith.truncf %5 : vector<8x32xf32> to vector<8x32xbf16>
    %7 = arith.subf %1, %4 : vector<16x32xf32>
    %8 = arith.truncf %7 : vector<16x32xf32> to vector<16x32xbf16>
    %cst = arith.constant dense<0.000000e+00> : vector<8x16xf32>
    %9 = tpu.matmul %6, %8, %cst {dimension_numbers = #tpu.dot_dimension_numbers<[1], [1], [0], [0], [0, 0, 1, 0], [], []>} : vector<8x32xbf16>, vector<16x32xbf16>, vector<8x16xf32> -> vector<8x16xf32>
    %10 = math.tanh %9 : vector<8x16xf32>
    %11 = arith.addf %10, %3 : vector<8x16xf32>
    %c0_9 = arith.constant 0 : index
    %c0_10 = arith.constant 0 : index
    %12 = vector.load %arg5[%c0_9, %c0_10] : memref<8x16xf32, #tpu.memory_space<vmem>>, vector<8x16xf32>
    tpu.vector_store %arg5[%c0_9, %c0_10], %11 {strides = array<i32>} : memref<8x16xf32, #tpu.memory_space<vmem>>, vector<8x16xf32>,
    return
  }
  func.func @transform_0(%arg0: i32) -> (i32, i32) {
    %c0_i32 = arith.constant 0 : i32
    %c0_i32_0 = arith.constant 0 : i32
    return %arg0, %c0_i32 : i32, i32
  }
  func.func @transform_1(%arg0: i32) -> (i32, i32) {
    %c0_i32 = arith.constant 0 : i32
    %c0_i32_0 = arith.constant 0 : i32
    %c0_i32_1 = arith.constant 0 : i32
    return %c0_i32, %c0_i32_0 : i32, i32
  }
  func.func @transform_2(%arg0: i32) -> (i32, i32) {
    %c0_i32 = arith.constant 0 : i32
    %c0_i32_0 = arith.constant 0 : i32
    %c0_i32_1 = arith.constant 0 : i32
    return %c0_i32, %c0_i32_0 : i32, i32
  }
  func.func @transform_3(%arg0: i32) -> (i32, i32) {
    %c0_i32 = arith.constant 0 : i32
    %c0_i32_0 = arith.constant 0 : i32
    return %arg0, %c0_i32 : i32, i32
  }
  func.func @transform_4(%arg0: i32) -> (i32, i32) {
    %c0_i32 = arith.constant 0 : i32
    %c0_i32_0 = arith.constant 0 : i32
    return %arg0, %c0_i32 : i32, i32
  }
}

</mosaic_0001>

<llo_original>
// kernel: tpu_custom_call.1
$region0: #{tpu_custom_call.1}
  #allocation0 [shape = 'u32[]', space=smem, size = 0x4, offset = 0x4, fixed_abs, tag = 'smem constant byte address 0x4 - core index']
  #allocation1 [shape = 'u32[144,128]{1,0:T(1,128)}', space=vmem, size = 0x12000, scoped, tag = 'internal scratch']
  %s0 = inlined_call_operand.hbm [shape: f32[8,32], index: 0, kind: input, shape index: {}]
  %s1 = inlined_call_operand.hbm [shape: f32[16,32], index: 1, kind: input, shape index: {}]
  %s2 = inlined_call_operand.hbm [shape: f32[128,256], index: 2, kind: input, shape index: {}]
  %s3 = inlined_call_operand.hbm [shape: f32[128,256], index: 3, kind: input, shape index: {}]
  %s4 = inlined_call_operand.hbm [shape: f32[8,16], index: 4, kind: output, shape index: {}]
  %s5 = sld [smem:[#allocation0]]
  $region42: #{tpu_custom_call.1} parent=0
    _
  %s7 = ssub.s32 1, %s5
  %s8 = scalar_select 0, %s7, %s5
  $region1: #{tpu_custom_call.1} parent=0
    #allocation2 [shape = 'u8[4096]{0}', space=vmem, size = 0x1000, scoped, tag = 'input window, operand 0, single buffered']
    #allocation3 [shape = 's32[1]{0}', space=sflag, size = 0x4, scoped, tag = 'scoped memory for tpu_custom_call.1']
    #allocation4 [shape = 's32[1]{0}', space=sflag, size = 0x4, scoped, tag = 'scoped memory for tpu_custom_call.1']
    #allocation5 [shape = 'u8[8192]{0}', space=vmem, size = 0x2000, scoped, tag = 'input window, operand 1, single buffered']
    #allocation6 [shape = 's32[1]{0}', space=sflag, size = 0x4, scoped, tag = 'scoped memory for tpu_custom_call.1']
    #allocation7 [shape = 'u8[8192]{0}', space=vmem, size = 0x2000, scoped, tag = 'input window, operand 2, single buffered']
    #allocation8 [shape = 'u8[4096]{0}', space=vmem, size = 0x1000, scoped, tag = 'input window, operand 3, single buffered']
    #allocation9 [shape = 's32[1]{0}', space=sflag, size = 0x4, scoped, tag = 'scoped memory for tpu_custom_call.1']
    #allocation10 [shape = 'u8[4096]{0}', space=vmem, size = 0x1000, scoped, tag = 'output window, operand 0, single buffered']
    %9 = vsyncpa [#allocation3], 0
    %10 = vsyncpa [#allocation6], 0
    %11 = vsyncpa [#allocation9], 0
    %12 = vsyncpa [#allocation4], 0
    // Predicated region
    $region2: #{tpu_custom_call.1} parent=1 // pred_check
      _
    $region3: #{tpu_custom_call.1} parent=1 // pred_check_branch
      %14 = sbr.rel (0) target = $region5
    $region4: #{tpu_custom_call.1} parent=1 // pred_region
      %s16 = ssub.s32 128, 128
      %17 = vsyncadd [#allocation3], %s16
      %s19 = sshll.u32 [#allocation2], 4
      %s20 = int_to_ptr.vmem [resolvable:$true] %s19
      %22 = dma.hbm_to_vmem [thread:$0]  %s0, 128, %s20, [#allocation3]
    $region5: #{tpu_custom_call.1} parent=1 // pred_fallthru
      _
    // Predicated region
    $region6: #{tpu_custom_call.1} parent=1 // pred_check
      _
    $region7: #{tpu_custom_call.1} parent=1 // pred_check_branch
      %24 = sbr.rel (0) target = $region9
    $region8: #{tpu_custom_call.1} parent=1 // pred_region
      %s26 = ssub.s32 256, 256
      %27 = vsyncadd [#allocation6], %s26
      %s28 = sshll.u32 [#allocation5], 4
      %s29 = int_to_ptr.vmem [resolvable:$true] %s28
      %34 = dma.hbm_to_vmem [thread:$0]  %s1, 256, %s29, [#allocation6], 128, 128, 8
    $region9: #{tpu_custom_call.1} parent=1 // pred_fallthru
      _
    // Predicated region
    $region10: #{tpu_custom_call.1} parent=1 // pred_check
      _
    $region11: #{tpu_custom_call.1} parent=1 // pred_check_branch
      %36 = sbr.rel (0) target = $region13
    $region12: #{tpu_custom_call.1} parent=1 // pred_region
      %s38 = ssub.s32 256, 256
      %39 = vsyncadd [#allocation6], %s38
      %s40 = sshll.u32 [#allocation7], 4
      %s41 = int_to_ptr.vmem [resolvable:$true] %s40
      %46 = dma.hbm_to_vmem [thread:$0]  %s2, 256, %s41, [#allocation6], 256, 128, 8
    $region13: #{tpu_custom_call.1} parent=1 // pred_fallthru
      _
    // Predicated region
    $region14: #{tpu_custom_call.1} parent=1 // pred_check
      _
    $region15: #{tpu_custom_call.1} parent=1 // pred_check_branch
      %48 = sbr.rel (0) target = $region17
    $region16: #{tpu_custom_call.1} parent=1 // pred_region
      %s50 = ssub.s32 128, 128
      %51 = vsyncadd [#allocation9], %s50
      %s53 = sshll.u32 [#allocation8], 4
      %s54 = int_to_ptr.vmem [resolvable:$true] %s53
      %56 = dma.hbm_to_vmem [thread:$0]  %s3, 128, %s54, [#allocation9]
    $region17: #{tpu_custom_call.1} parent=1 // pred_fallthru
      _
    // Predicated region
    $region18: #{tpu_custom_call.1} parent=1 // pred_check
      _
    $region19: #{tpu_custom_call.1} parent=1 // pred_check_branch
      %58 = sbr.rel (0) target = $region21
    $region20: #{tpu_custom_call.1} parent=1 // pred_region
      %59 = dma.done [#allocation3], 128
    $region21: #{tpu_custom_call.1} parent=1 // pred_fallthru
      _
    // Predicated region
    $region22: #{tpu_custom_call.1} parent=1 // pred_check
      _
    $region23: #{tpu_custom_call.1} parent=1 // pred_check_branch
      %61 = sbr.rel (0) target = $region25
    $region24: #{tpu_custom_call.1} parent=1 // pred_region
      %62 = dma.done [#allocation6], 256
    $region25: #{tpu_custom_call.1} parent=1 // pred_fallthru
      _
    // Predicated region
    $region26: #{tpu_custom_call.1} parent=1 // pred_check
      _
    $region27: #{tpu_custom_call.1} parent=1 // pred_check_branch
      %64 = sbr.rel (0) target = $region29
    $region28: #{tpu_custom_call.1} parent=1 // pred_region
      %65 = dma.done [#allocation6], 256
    $region29: #{tpu_custom_call.1} parent=1 // pred_fallthru
      _
    // Predicated region
    $region30: #{tpu_custom_call.1} parent=1 // pred_check
      _
    $region31: #{tpu_custom_call.1} parent=1 // pred_check_branch
      %67 = sbr.rel (0) target = $region33
    $region32: #{tpu_custom_call.1} parent=1 // pred_region
      %68 = dma.done [#allocation9], 128
    $region33: #{tpu_custom_call.1} parent=1 // pred_fallthru
      _
    %v70 = vld [vmem:[#allocation2] sm:$0xff]
    %v71 = vld [vmem:[#allocation5] sm:$0xff]
    %v72 = vld [vmem:[#allocation5 + $0x8] sm:$0xff]
    %v73 = vld [vmem:[#allocation8] sm:$0xff]
    %v74 = vld [vmem:[#allocation7] sm:$0xff]
    %v75 = vld [vmem:[#allocation7 + $0x8] sm:$0xff]
    %v76 = vsub.f32 %v70, %v73
    %v77 = vpack.c.bf16 %v76, %v76
    %v78 = vsub.f32 %v71, %v74
    %v79 = vsub.f32 %v72, %v75
    %v80 = vpack.c.bf16 %v79, %v78
    %vm81 = vcmask 261120
    %v83 = vsel %vm81, %v77, 0
    %v86 = vsel %vm81, %v80, 0
    %88 = vmatprep.subr.bf16.mxu0 0
    %89 = vmatpush1.bf16.xpose.msra.mxu0 %v86
    %90 = vmatprep.subr.bf16.mxu0 0
    %91 = vmatpush1.bf16.xpose.msra.mxu0 0
    %92 = vmatprep.subr.bf16.mxu0 0
    %93 = vmatpush1.bf16.xpose.msra.mxu0 0
    %94 = vmatprep.subr.bf16.mxu0 0
    %95 = vmatpush1.bf16.xpose.msra.mxu0 0
    %96 = vmatprep.subr.bf16.mxu0 0
    %97 = vmatpush1.bf16.xpose.msra.mxu0 0
    %98 = vmatprep.subr.bf16.mxu0 0
    %99 = vmatpush1.bf16.xpose.msra.mxu0 0
    %100 = vmatprep.subr.bf16.mxu0 0
    %101 = vmatpush1.bf16.xpose.msra.mxu0 0
    %102 = vmatprep.subr.bf16.mxu0 0
    %103 = vmatpush1.bf16.xpose.msra.mxu0 0
    %104 = vmatprep.subr.bf16.mxu0 0
    %105 = vmatpush1.bf16.xpose.msra.mxu0 0
    %106 = vmatprep.subr.bf16.mxu0 0
    %107 = vmatpush1.bf16.xpose.msra.mxu0 0
    %108 = vmatprep.subr.bf16.mxu0 0
    %109 = vmatpush1.bf16.xpose.msra.mxu0 0
    %110 = vmatprep.subr.bf16.mxu0 0
    %111 = vmatpush1.bf16.xpose.msra.mxu0 0
    %112 = vmatprep.subr.bf16.mxu0 0
    %113 = vmatpush1.bf16.xpose.msra.mxu0 0
    %114 = vmatprep.subr.bf16.mxu0 0
    %115 = vmatpush1.bf16.xpose.msra.mxu0 0
    %116 = vmatprep.subr.bf16.mxu0 0
    %117 = vmatpush1.bf16.xpose.msra.mxu0 0
    %118 = vmatprep.subr.bf16.mxu0 0
    %119 = vmatpush1.bf16.xpose.msra.mxu0 0
    %120 = vmatprep.mubr.bf16.mxu0 0
    %121 = vmatmul.mubr.bf16.gmra.mrb[0].mxu0 %v83
    %v122 = vpop.f32.mrb[0].mxu0
    %v123 = vadd.f32 0.0, %v122
    %v124 = vpop.f32.mrb[0].mxu0
    %v125 = vpop.f32.mrb[0].mxu0
    %v126 = vpop.f32.mrb[0].mxu0
    %127 = vdwg.mxu0
    %v128 = vtanh.pop %v123
    %v129 = vadd.f32 %v128, %v73
    %vm130 = vcmask 130048
    %131 = vst.msk [vmem:[#allocation10] sm:$0xff] %vm130, %v129
    // Predicated region
    $region34: #{tpu_custom_call.1} parent=1 // pred_check
      _
    $region35: #{tpu_custom_call.1} parent=1 // pred_check_branch
      %133 = sbr.rel (0) target = $region37
    $region36: #{tpu_custom_call.1} parent=1 // pred_region
      %s135 = ssub.s32 128, 128
      %136 = vsyncadd [#allocation4], %s135
      %s138 = sshll.u32 [#allocation10], 4
      %s139 = int_to_ptr.vmem [resolvable:$true] %s138
      %141 = dma.vmem_to_hbm [thread:$0]  %s139, 128, %s4, [#allocation4]
    $region37: #{tpu_custom_call.1} parent=1 // pred_fallthru
      _
    // Predicated region
    $region38: #{tpu_custom_call.1} parent=1 // pred_check
      _
    $region39: #{tpu_custom_call.1} parent=1 // pred_check_branch
      %143 = sbr.rel (0) target = $region41
    $region40: #{tpu_custom_call.1} parent=1 // pred_region
      %144 = dma.done [#allocation4], 128
    $region41: #{tpu_custom_call.1} parent=1 // pred_fallthru
      _
    %145 = vsyncpa [#allocation3], 1
    %146 = vsyncpa [#allocation6], 1
    %147 = vsyncpa [#allocation9], 1
    %148 = vsyncpa [#allocation4], 1

</llo_original>
